<compile_context>
chip_gen: v7x
topology: tpu7x:2x2x1
jax: 0.10.0
libtpu: 0.0.40
codegen_flags: <defaults>
</compile_context>

<pallas_src>
import functools
import math

import jax
import jax.numpy as jnp
from jax import lax
from jax.experimental import pallas as pl
from jax.experimental.pallas import tpu as pltpu

_LANE = 128
_VMEM_TILE_BUDGET = 40 * 1024 * 1024  # keep tiles well inside v7x's 64 MiB VMEM


def _round_up(x, m):
    return ((x + m - 1) // m) * m


def _cdiv(a, b):
    return -(-a // b)


def _pick_k_tile(k_dim, tk_max):
    """Reduction tile.  Prefer an exact divisor (no masking); otherwise a
    lane-aligned tile plus in-kernel masking of the ragged last block."""
    if k_dim <= tk_max:
        return k_dim                               # single full-K block
    top = max(_LANE, (tk_max // _LANE) * _LANE)
    for cand in range(top, _LANE - 1, -_LANE):
        if k_dim % cand == 0:
            return cand
    return top                                     # ragged last block (masked)


def _pick_n_tile(n_pad, tn_max):
    """Output tile.  n_pad is already a multiple of 128 (lane-dense)."""
    tn_aligned = max(_LANE, (tn_max // _LANE) * _LANE)
    if n_pad <= tn_aligned:
        return n_pad
    for cand in range(tn_aligned, _LANE - 1, -_LANE):
        if n_pad % cand == 0:
            return cand
    return _LANE


def _vmem_bytes(tm, tn, tk, in_isz, out_isz):
    # 2x: BlockSpec double-buffers every streamed operand.
    return (2 * tm * tk * in_isz          # x tile
            + 2 * tn * tk * in_isz        # weight tile
            + 2 * tn * in_isz             # bias tile
            + 2 * tm * tn * out_isz       # output tile
            + tm * tn * 4)                # f32 accumulator scratch


def _fc_kernel(seed_ref, x_ref, w_ref, b_ref, o_ref, acc_ref, *,
               use_relu, dropout_r, drop_threshold,
               tile_m, tile_n, tile_k, n_total, k_rem):
    # x_ref: (tm, tk)   w_ref: (tn, tk)   b_ref: (1, tn)
    # o_ref: (tm, tn)   acc_ref: (tm, tn) f32 scratch
    k = pl.program_id(2)
    nk = pl.num_programs(2)
    # All pl.program_id / pl.num_programs / scalar reads stay at the top level
    # (outside pl.when bodies): inside cond branches they have no CPU lowering
    # under interpret mode, and they are cheap scalars anyway.
    if dropout_r > 0.0:
        blk_i = pl.program_id(0)
        blk_j = pl.program_id(1)
        seed = seed_ref[0]

    @pl.when(k == 0)
    def _init():
        # Bias folded into the accumulator init: removes a full (tm, tn) f32
        # add from the epilogue at zero extra cost (the init store runs anyway).
        acc_ref[...] = jnp.broadcast_to(
            b_ref[...].astype(jnp.float32), acc_ref.shape)

    x_blk = x_ref[...]
    w_blk = w_ref[...]
    if k_rem:
        # Ragged last K block: zero the invalid columns of BOTH operands so
        # out-of-bounds HBM garbage (possibly NaN/Inf) cannot reach the MXU
        # accumulation.  Statically omitted when tile_k divides K exactly.
        valid = jnp.where(k == nk - 1, jnp.int32(k_rem), jnp.int32(tile_k))
        x_blk = jnp.where(
            lax.broadcasted_iota(jnp.int32, x_blk.shape, 1) < valid, x_blk, 0)
        w_blk = jnp.where(
            lax.broadcasted_iota(jnp.int32, w_blk.shape, 1) < valid, w_blk, 0)

    # x @ W^T on the MXU.  Weight stays in its torch (out_size, in_size)
    # layout; the transposed contraction is expressed via dimension_numbers
    # (== pl.dot(..., trans_b=True)), so there is no wrapper-side HBM pass.
    acc_ref[...] += lax.dot_general(
        x_blk, w_blk,
        dimension_numbers=(((1,), (1,)), ((), ())),
        preferred_element_type=jnp.float32)

    @pl.when(k == nk - 1)
    def _finalize():
        out = acc_ref[...]
        if use_relu:
            out = jnp.maximum(out, 0.0)
        if dropout_r > 0.0:
            # Inverted dropout (PyTorch training semantics).  Portable
            # counter-based PRNG: murmur3 fmix32 of (global element idx, seed).
            # TODO(synk): RNG stream differs from torch's Philox generator.
            row = blk_i * tile_m + lax.broadcasted_iota(jnp.int32, out.shape, 0)
            col = blk_j * tile_n + lax.broadcasted_iota(jnp.int32, out.shape, 1)
            u = (row.astype(jnp.uint32) * jnp.uint32(n_total)
                 + col.astype(jnp.uint32))
            u = u + seed.astype(jnp.uint32) * jnp.uint32(0x9E3779B9)
            u = (u ^ (u >> 16)) * jnp.uint32(0x85EBCA6B)
            u = (u ^ (u >> 13)) * jnp.uint32(0xC2B2AE35)
            u = u ^ (u >> 16)
            keep = u >= jnp.uint32(drop_threshold)        # P(keep) = 1 - p
            out = jnp.where(keep,
                            out * jnp.float32(1.0 / (1.0 - dropout_r)),
                            jnp.float32(0.0))
        o_ref[...] = out.astype(o_ref.dtype)


def fc_forward(x, weight, bias, *, dropout_r=0.0, use_relu=True, seed=0,
               tm=512, tn=512, tk=1024, auto_tile=True, compute_dtype=None):
    """Pallas implementation of FC.forward.

    x:      (..., in_size)
    weight: (out_size, in_size)   -- torch nn.Linear.weight layout
    bias:   (out_size,)
    """
    orig_shape = x.shape
    K = orig_shape[-1]
    N, K_w = weight.shape
    assert K_w == K, "weight in_size mismatch"
    M = int(math.prod(orig_shape[:-1])) if len(orig_shape) > 1 else 1

    out_dtype = x.dtype
    x2 = x.reshape(M, K)
    if compute_dtype is not None:      # e.g. jnp.bfloat16 for MXU peak
        x2 = x2.astype(compute_dtype)
        weight = weight.astype(compute_dtype)

    # Lane-dense output: pad out_size to a multiple of 128 once here (zero
    # rows of W / zeros of b) and slice back after, instead of masked partial
    # stores on every output tile.
    n_pad = _round_up(N, _LANE)
    if n_pad != N:
        weight = jnp.pad(weight, ((0, n_pad - N), (0, 0)))
        bias = jnp.pad(bias, ((0, n_pad - N),))
    b2 = bias.reshape(1, n_pad)

    in_isz = jnp.dtype(x2.dtype).itemsize
    out_isz = jnp.dtype(out_dtype).itemsize
    sublane = 16 if x2.dtype == jnp.bfloat16 else 8

    # ---------------- tile selection ----------------
    m_ceil = _round_up(M, sublane)
    tm_t = min(_round_up(max(tm, sublane), sublane), m_ceil)
    tn_t = _pick_n_tile(n_pad, tn)
    tk_t = _pick_k_tile(K, tk)

    if auto_tile:
        # Bias tiles toward HBM reuse: streamed traffic ~ gm*|W| + gn*|X|, so
        # grow the tile covering the larger operand first (weight traffic is
        # re-read gm times; activations gn times).
        w_total = n_pad * K * in_isz
        x_total = M * K * in_isz
        if w_total >= x_total:
            while tm_t < m_ceil:
                cand = min(_round_up(tm_t * 2, sublane), m_ceil)
                if cand == tm_t or _vmem_bytes(cand, tn_t, tk_t, in_isz,
                                               out_isz) > _VMEM_TILE_BUDGET:
                    break
                tm_t = cand
        else:
            while tn_t < n_pad and n_pad % (tn_t * 2) == 0:
                cand = tn_t * 2
                if _vmem_bytes(tm_t, cand, tk_t, in_isz,
                               out_isz) > _VMEM_TILE_BUDGET:
                    break
                tn_t = cand

    gm = _cdiv(M, tm_t)
    gn = _cdiv(n_pad, tn_t)
    if auto_tile and gm * gn == 1:
        # Give v7x's two TensorCores at least two parallel blocks.
        if tn_t % 256 == 0:
            tn_t //= 2
        elif tm_t >= 2 * sublane:
            tm_t = _round_up(_cdiv(tm_t, 2), sublane)
        gm = _cdiv(M, tm_t)
        gn = _cdiv(n_pad, tn_t)
    gk = _cdiv(K, tk_t)
    k_rem = K % tk_t   # nonzero -> ragged last K block, masked in-kernel

    drop_threshold = 0
    if dropout_r > 0.0:
        drop_threshold = min(int(round(dropout_r * 4294967296.0)), 4294967295)
    seed_arr = jnp.array([int(seed) & 0x7FFFFFFF], dtype=jnp.int32)

    kernel = functools.partial(
        _fc_kernel,
        use_relu=bool(use_relu),
        dropout_r=float(dropout_r),
        drop_threshold=drop_threshold,
        tile_m=tm_t, tile_n=tn_t, tile_k=tk_t,
        n_total=n_pad, k_rem=k_rem)

    # Honest streamed-traffic estimate: W is re-read gm times, X gn times.
    cost = pl.CostEstimate(
        flops=2 * M * K * n_pad,
        transcendentals=0,
        bytes_accessed=int(gm * n_pad * K * in_isz
                           + gn * M * K * in_isz
                           + M * n_pad * out_isz
                           + n_pad * in_isz))

    vmem_limit = int(max(48 * 1024 * 1024,
                         _vmem_bytes(tm_t, tn_t, tk_t, in_isz, out_isz)
                         + 8 * 1024 * 1024))

    out = pl.pallas_call(
        kernel,
        out_shape=jax.ShapeDtypeStruct((M, n_pad), out_dtype),
        grid_spec=pltpu.PrefetchScalarGridSpec(
            num_scalar_prefetch=1,
            grid=(gm, gn, gk),
            in_specs=[
                pl.BlockSpec((tm_t, tk_t), lambda i, j, k, seed: (i, k)),
                pl.BlockSpec((tn_t, tk_t), lambda i, j, k, seed: (j, k)),
                pl.BlockSpec((1, tn_t), lambda i, j, k, seed: (0, j)),
            ],
            out_specs=pl.BlockSpec((tm_t, tn_t), lambda i, j, k, seed: (i, j)),
            scratch_shapes=[pltpu.VMEM((tm_t, tn_t), jnp.float32)],
        ),
        compiler_params=pltpu.CompilerParams(
            dimension_semantics=("parallel", "parallel", "arbitrary"),
            vmem_limit_bytes=vmem_limit),
        cost_estimate=cost,
    )(seed_arr, x2, weight, b2)

    if n_pad != N:
        out = out[:, :N]
    return out.reshape(orig_shape[:-1] + (N,))


def init_fc_params(key, in_size, out_size, dtype=jnp.float32):
    # Deterministic init mimicking nn.Linear default (uniform +-1/sqrt(in)).
    kw, kb = jax.random.split(key)
    bound = 1.0 / math.sqrt(in_size)
    weight = jax.random.uniform(kw, (out_size, in_size), dtype, -bound, bound)
    bias = jax.random.uniform(kb, (out_size,), dtype, -bound, bound)
    return weight, bias


if __name__ == "__main__":
    key = jax.random.PRNGKey(0)
    ks = jax.random.split(key, 6)
    HI = jax.lax.Precision.HIGHEST

    def fc_ref(x, w, b, use_relu=True):
        y = jnp.einsum("...k,nk->...n", x, w, precision=HI) + b
        return jnp.maximum(y, 0.0) if use_relu else y

    # 1) Small shapes consistent with the module (batch, seq, hidden).
    batch, seq, in_size, out_size = 2, 8, 32, 64
    x = jax.random.normal(ks[0], (batch, seq, in_size), dtype=jnp.float32)
    weight, bias = init_fc_params(ks[1], in_size, out_size)

    y = jax.block_until_ready(fc_forward(x, weight, bias, dropout_r=0.0,
                                         use_relu=True))
    ref = fc_ref(x, weight, bias)
    assert y.shape == (batch, seq, out_size)
    assert jnp.allclose(y, ref, atol=1e-5, rtol=1e-5), "relu FC mismatch"

    # use_relu=False branch (pure linear).
    y_lin = jax.block_until_ready(fc_forward(x, weight, bias, use_relu=False))
    assert jnp.allclose(y_lin, fc_ref(x, weight, bias, use_relu=False),
                        atol=1e-5, rtol=1e-5), "linear mismatch"

    # 2) Multi-block M/N/K tiled path with exact tiling (grid (2, 4, 3)).
    xb = jax.random.normal(ks[2], (4, 32, 384), dtype=jnp.float32)
    wb, bb = init_fc_params(ks[3], 384, 512)
    y_big = jax.block_until_ready(
        fc_forward(xb, wb, bb, use_relu=True, tm=64, tn=128, tk=128,
                   auto_tile=False))
    assert jnp.allclose(y_big, fc_ref(xb, wb, bb),
                        atol=1e-4, rtol=1e-4), "tiled mismatch"

    # 3) Ragged M and ragged (in-kernel masked) K tails.
    xr = jax.random.normal(ks[4], (3, 5, 200), dtype=jnp.float32)
    wr, br = init_fc_params(ks[5], 200, 256)
    y_rag = jax.block_until_ready(
        fc_forward(xr, wr, br, use_relu=True, tm=8, tn=128, tk=128,
                   auto_tile=False))
    assert jnp.allclose(y_rag, fc_ref(xr, wr, br),
                        atol=1e-4, rtol=1e-4), "ragged-tail mismatch"

    # 4) Dropout path (inverted dropout; RNG stream differs from torch).
    p = 0.25
    yd = jax.block_until_ready(
        fc_forward(x, weight, bias, dropout_r=p, use_relu=True, seed=123))
    kept = yd != 0.0
    assert jnp.allclose(jnp.where(kept, yd, 0.0),
                        jnp.where(kept, ref / (1.0 - p), 0.0),
                        atol=1e-4, rtol=1e-4), "dropout scaling mismatch"
    pos = ref > 0
    assert bool(jnp.any(pos & (yd == 0.0))), "dropout dropped nothing"
    assert bool(jnp.any(kept)), "dropout dropped everything"

    print("KERNEL_OK")
</pallas_src>

<mosaic_0001>
module attributes {stable_mosaic.version = 11 : i64} {
  func.func @_fc_kernel(%arg0: i32, %arg1: i32, %arg2: i32, %arg3: memref<1xi32, #tpu.memory_space<smem>>, %arg4: memref<8x32xf32, #tpu.memory_space<vmem>>, %arg5: memref<128x32xf32, #tpu.memory_space<vmem>>, %arg6: memref<1x128xf32, #tpu.memory_space<vmem>>, %arg7: memref<8x128xf32, #tpu.memory_space<vmem>>, %arg8: memref<8x128xf32, #tpu.memory_space<vmem>>) attributes {dimension_semantics = [#tpu.dimension_semantics<parallel>, #tpu.dimension_semantics<parallel>, #tpu.dimension_semantics<arbitrary>], iteration_bounds = array<i64: 2, 1, 1>, scalar_prefetch = 1 : i64, scratch_operands = 1 : i64, tpu.core_type = #tpu.core_type<tc>, window_params = [{transform_indices = @transform_0, window_bounds = array<i64: 8, 32>}, {transform_indices = @transform_1, window_bounds = array<i64: 128, 32>}, {transform_indices = @transform_2, window_bounds = array<i64: 1, 128>}, {transform_indices = @transform_3, window_bounds = array<i64: 8, 128>}]} {
    %c0_i32 = arith.constant 0 : i32
    %0 = arith.cmpi eq, %arg2, %c0_i32 : i32
    %1 = arith.extui %0 : i1 to i32
    %c0_i32_0 = arith.constant 0 : i32
    %2 = arith.cmpi ne, %1, %c0_i32_0 : i32
    scf.if %2 {
      %c0_10 = arith.constant 0 : index
      %c0_11 = arith.constant 0 : index
      %12 = vector.load %arg6[%c0_10, %c0_11] : memref<1x128xf32, #tpu.memory_space<vmem>>, vector<1x128xf32>
      %13 = vector.shape_cast %12 : vector<1x128xf32> to vector<1x128xf32>
      %14 = vector.broadcast %13 : vector<1x128xf32> to vector<8x128xf32>
      %c0_12 = arith.constant 0 : index
      %c0_13 = arith.constant 0 : index
      %15 = vector.load %arg8[%c0_12, %c0_13] : memref<8x128xf32, #tpu.memory_space<vmem>>, vector<8x128xf32>
      tpu.vector_store %arg8[%c0_12, %c0_13], %14 {strides = array<i32>} : memref<8x128xf32, #tpu.memory_space<vmem>>, vector<8x128xf32>,
    } else {
    }
    %c0 = arith.constant 0 : index
    %c0_1 = arith.constant 0 : index
    %3 = vector.load %arg4[%c0, %c0_1] : memref<8x32xf32, #tpu.memory_space<vmem>>, vector<8x32xf32>
    %c0_2 = arith.constant 0 : index
    %c0_3 = arith.constant 0 : index
    %4 = vector.load %arg5[%c0_2, %c0_3] : memref<128x32xf32, #tpu.memory_space<vmem>>, vector<128x32xf32>
    %c0_4 = arith.constant 0 : index
    %c0_5 = arith.constant 0 : index
    %5 = vector.load %arg8[%c0_4, %c0_5] : memref<8x128xf32, #tpu.memory_space<vmem>>, vector<8x128xf32>
    %cst = arith.constant dense<0.000000e+00> : vector<8x128xf32>
    %6 = tpu.matmul %3, %4, %cst {dimension_numbers = #tpu.dot_dimension_numbers<[1], [1], [0], [0], [0, 0, 1, 0], [], []>} : vector<8x32xf32>, vector<128x32xf32>, vector<8x128xf32> -> vector<8x128xf32>
    %7 = arith.addf %5, %6 : vector<8x128xf32>
    %c0_6 = arith.constant 0 : index
    %c0_7 = arith.constant 0 : index
    %8 = vector.load %arg8[%c0_6, %c0_7] : memref<8x128xf32, #tpu.memory_space<vmem>>, vector<8x128xf32>
    tpu.vector_store %arg8[%c0_6, %c0_7], %7 {strides = array<i32>} : memref<8x128xf32, #tpu.memory_space<vmem>>, vector<8x128xf32>,
    %c0_i32_8 = arith.constant 0 : i32
    %9 = arith.cmpi eq, %arg2, %c0_i32_8 : i32
    %10 = arith.extui %9 : i1 to i32
    %c0_i32_9 = arith.constant 0 : i32
    %11 = arith.cmpi ne, %10, %c0_i32_9 : i32
    scf.if %11 {
      %c0_10 = arith.constant 0 : index
      %c0_11 = arith.constant 0 : index
      %12 = vector.load %arg8[%c0_10, %c0_11] : memref<8x128xf32, #tpu.memory_space<vmem>>, vector<8x128xf32>
      %cst_12 = arith.constant 0.000000e+00 : f32
      %13 = vector.broadcast %cst_12 : f32 to vector<8x128xf32>
      %14 = arith.maximumf %12, %13 : vector<8x128xf32>
      %c0_13 = arith.constant 0 : index
      %c0_14 = arith.constant 0 : index
      %15 = vector.load %arg7[%c0_13, %c0_14] : memref<8x128xf32, #tpu.memory_space<vmem>>, vector<8x128xf32>
      tpu.vector_store %arg7[%c0_13, %c0_14], %14 {strides = array<i32>} : memref<8x128xf32, #tpu.memory_space<vmem>>, vector<8x128xf32>,
    } else {
    }
    return
  }
  func.func @transform_0(%arg0: i32, %arg1: i32, %arg2: i32, %arg3: memref<1xi32, #tpu.memory_space<smem>>) -> (i32, i32) {
    %c0_i32 = arith.constant 0 : i32
    return %arg0, %arg2 : i32, i32
  }
  func.func @transform_1(%arg0: i32, %arg1: i32, %arg2: i32, %arg3: memref<1xi32, #tpu.memory_space<smem>>) -> (i32, i32) {
    %c0_i32 = arith.constant 0 : i32
    return %arg1, %arg2 : i32, i32
  }
  func.func @transform_2(%arg0: i32, %arg1: i32, %arg2: i32, %arg3: memref<1xi32, #tpu.memory_space<smem>>) -> (i32, i32) {
    %c0_i32 = arith.constant 0 : i32
    %c0_i32_0 = arith.constant 0 : i32
    return %c0_i32, %arg1 : i32, i32
  }
  func.func @transform_3(%arg0: i32, %arg1: i32, %arg2: i32, %arg3: memref<1xi32, #tpu.memory_space<smem>>) -> (i32, i32) {
    %c0_i32 = arith.constant 0 : i32
    return %arg0, %arg1 : i32, i32
  }
}

</mosaic_0001>

<llo_original>
// kernel: tpu_custom_call.1
$region0: #{tpu_custom_call.1}
  #allocation0 [shape = 'u32[]', space=smem, size = 0x4, offset = 0x4, fixed_abs, tag = 'smem constant byte address 0x4 - core index']
  #allocation1 [shape = 'u32[144,128]{1,0:T(1,128)}', space=vmem, size = 0x12000, scoped, tag = 'internal scratch']
  #allocation2 [shape = 'f32[8,128]{1,0:T(8,128)}', space=vmem, size = 0x1000, scoped, tag = 'scratch operand']
  #allocation3 [shape = 's32[1]{0}', space=sflag, size = 0x4, scoped, tag = 'scoped memory for tpu_custom_call.1']
  #allocation4 [shape = 's32[1]{0:T(128)S(6)}', space=smem, size = 0x200, scoped, tag = 'prefetched SMEM operand 0']
  %s0 = inlined_call_operand.<no memory space> [shape: s32[1], index: 0, kind: input, shape index: {}]
  %s1 = inlined_call_operand.vmem [shape: f32[16,32], index: 1, kind: input, shape index: {}]
  %s2 = inlined_call_operand.vmem [shape: f32[128,32], index: 2, kind: input, shape index: {}]
  %s3 = inlined_call_operand.vmem [shape: f32[1,128], index: 3, kind: input, shape index: {}]
  %s4 = inlined_call_operand.hbm [shape: f32[16,128], index: 4, kind: output, shape index: {}]
  %s5 = sld [smem:[#allocation0]]
  $region53: #{tpu_custom_call.1} parent=0
    _
  %s7 = ssub.s32 1, %s5
  %s8 = scalar_select 0, %s7, %s5
  %9 = sst [smem:[#allocation4]] %s0
  $region1: #{tpu_custom_call.1} parent=0
    #allocation5 [shape = 'u8[8192]{0}', space=vmem, size = 0x2000, scoped, tag = 'output window, operand 0']
    #allocation6 [shape = 's32[2]{0}', space=sflag, size = 0x8, scoped, tag = 'scoped memory for tpu_custom_call.1']
    %10 = vsyncpa [#allocation6], 0
    %s11 = scalar_lea.sflag [#allocation6], 1
    %12 = vsyncpa %s11, 0
    loop: start=0, step=1, limit=4
    $region2: #{tpu_custom_call.1} parent=1 // loop_pre_header
      _
    $region3: #{tpu_custom_call.1} parent=1 // loop_header
      %s14 = sphi 0, %s18
      %p15 = scmp.ge.s32.totalorder %s14, 4
      %s21 = sphi 0, %s40
      %s22 = sphi 0, %s36
      %s23 = sphi 0, %s32
      %s24 = sphi 0, %s21
      %s25 = sphi 0, %s22
      %s26 = sphi 0, %s23
      %s27 = sphi 0, %s24
      %s28 = sphi 0, %s25
      %s29 = sphi 0, %s26
      %s45 = sphi 0, %s47
      %s48 = sphi 0, %s45
      %s49 = sphi 0, %s48
      %s65 = sphi 0, %s49
      %s73 = sphi 0, %s75
      %s76 = sphi 0, %s73
      %s77 = sphi 0, %s76
      %s93 = sphi 0, %s77
      %s99 = sphi 0, %s101
      %s102 = sphi 0, %s99
      %s103 = sphi 0, %s102
      %s119 = sphi 0, %s103
      %s127 = sphi 0, %s129
      %s130 = sphi 0, %s127
      %s131 = sphi 0, %s130
      %s147 = sphi 0, %s131
    $region4: #{tpu_custom_call.1} parent=1 // loop_header_branch
      %17 = sbr.rel (%p15) target = $region8
    $region5: #{tpu_custom_call.1} parent=1 // loop_body
      %s19 = ssub.s32 %s14, 1
      %s20 = ssub.s32 %s14, 2
      %s30 = sadd.s32 1, %s23
      %p31 = scmp.ge.s32.totalorder %s30, 1
      %s32 = scalar_select %p31, 0, %s30
      %s33 = sadd.s32 1, %s22
      %s34 = scalar_select %p31, %s33, %s22
      %p35 = scmp.ge.s32.totalorder %s34, 1
      %s36 = scalar_select %p35, 0, %s34
      %s37 = sadd.s32 1, %s21
      %s38 = scalar_select %p35, %s37, %s21
      %p39 = scmp.ge.s32.totalorder %s38, 2
      %s40 = scalar_select %p39, 0, %s38
      %s41 = ssub.s32 %s21, %s40
      %s42 = ssub.s32 %s23, %s32
      %s43 = sor.u32 %s41, %s42
      %p44 = scmp.eq.s32.totalorder %s43, 0
      %s46 = sadd.s32 %s45, 1
      %s47 = scalar_select %p44, %s45, %s46
      %p50 = pneg %p44
      %p51 = scmp.eq.s32.totalorder %s14, 1
      %p52 = por %p50, %p51
      %p53 = scmp.ne.s32.totalorder %s45, %s48
      %p54 = scmp.eq.s32.totalorder %s14, 0
      %p55 = por %p53, %p54
      %p56 = scmp.ne.s32.totalorder %s45, %s48
      %p57 = scmp.eq.s32.totalorder %s19, 1
      %p58 = por %p56, %p57
      %p59 = scmp.ne.s32.totalorder %s48, %s49
      %p60 = scmp.eq.s32.totalorder %s19, 0
      %p61 = por %p59, %p60
      %p62 = scmp.ne.s32.totalorder %s48, %s49
      %p63 = scmp.eq.s32.totalorder %s20, 1
      %p64 = por %p62, %p63
      %p66 = scmp.ne.s32.totalorder %s49, %s65
      %p67 = scmp.eq.s32.totalorder %s20, 0
      %p68 = por %p66, %p67
      %s69 = ssub.s32 %s22, %s36
      %s70 = ssub.s32 %s23, %s32
      %s71 = sor.u32 %s69, %s70
      %p72 = scmp.eq.s32.totalorder %s71, 0
      %s74 = sadd.s32 %s73, 1
      %s75 = scalar_select %p72, %s73, %s74
      %p78 = pneg %p72
      %p79 = scmp.eq.s32.totalorder %s14, 1
      %p80 = por %p78, %p79
      %p81 = scmp.ne.s32.totalorder %s73, %s76
      %p82 = scmp.eq.s32.totalorder %s14, 0
      %p83 = por %p81, %p82
      %p84 = scmp.ne.s32.totalorder %s73, %s76
      %p85 = scmp.eq.s32.totalorder %s19, 1
      %p86 = por %p84, %p85
      %p87 = scmp.ne.s32.totalorder %s76, %s77
      %p88 = scmp.eq.s32.totalorder %s19, 0
      %p89 = por %p87, %p88
      %p90 = scmp.ne.s32.totalorder %s76, %s77
      %p91 = scmp.eq.s32.totalorder %s20, 1
      %p92 = por %p90, %p91
      %p94 = scmp.ne.s32.totalorder %s77, %s93
      %p95 = scmp.eq.s32.totalorder %s20, 0
      %p96 = por %p94, %p95
      %s97 = ssub.s32 %s22, %s36
      %p98 = scmp.eq.s32.totalorder %s97, 0
      %s100 = sadd.s32 %s99, 1
      %s101 = scalar_select %p98, %s99, %s100
      %p104 = pneg %p98
      %p105 = scmp.eq.s32.totalorder %s14, 1
      %p106 = por %p104, %p105
      %p107 = scmp.ne.s32.totalorder %s99, %s102
      %p108 = scmp.eq.s32.totalorder %s14, 0
      %p109 = por %p107, %p108
      %p110 = scmp.ne.s32.totalorder %s99, %s102
      %p111 = scmp.eq.s32.totalorder %s19, 1
      %p112 = por %p110, %p111
      %p113 = scmp.ne.s32.totalorder %s102, %s103
      %p114 = scmp.eq.s32.totalorder %s19, 0
      %p115 = por %p113, %p114
      %p116 = scmp.ne.s32.totalorder %s102, %s103
      %p117 = scmp.eq.s32.totalorder %s20, 1
      %p118 = por %p116, %p117
      %p120 = scmp.ne.s32.totalorder %s103, %s119
      %p121 = scmp.eq.s32.totalorder %s20, 0
      %p122 = por %p120, %p121
      %s123 = ssub.s32 %s21, %s40
      %s124 = ssub.s32 %s22, %s36
      %s125 = sor.u32 %s123, %s124
      %p126 = scmp.eq.s32.totalorder %s125, 0
      %s128 = sadd.s32 %s127, 1
      %s129 = scalar_select %p126, %s127, %s128
      %p132 = pneg %p126
      %p133 = scmp.eq.s32.totalorder %s14, 1
      %p134 = por %p132, %p133
      %p135 = scmp.ne.s32.totalorder %s127, %s130
      %p136 = scmp.eq.s32.totalorder %s14, 0
      %p137 = por %p135, %p136
      %p138 = scmp.ne.s32.totalorder %s127, %s130
      %p139 = scmp.eq.s32.totalorder %s19, 1
      %p140 = por %p138, %p139
      %p141 = scmp.ne.s32.totalorder %s130, %s131
      %p142 = scmp.eq.s32.totalorder %s19, 0
      %p143 = por %p141, %p142
      %p144 = scmp.ne.s32.totalorder %s130, %s131
      %p145 = scmp.eq.s32.totalorder %s20, 1
      %p146 = por %p144, %p145
      %p148 = scmp.ne.s32.totalorder %s131, %s147
      %p149 = scmp.eq.s32.totalorder %s20, 0
      %p150 = por %p148, %p149
      %p151 = scmp.le.s32.totalorder 1, %s14
      %p152 = scmp.lt.s32.totalorder %s14, 3
      %p153 = pnand %p151, %p152
      %p154 = pneg %p153
      // Predicated region
      $region9: #{tpu_custom_call.1} parent=5 // pred_check
        _
      $region10: #{tpu_custom_call.1} parent=5 // pred_check_branch
        %156 = sbr.rel (%p153) target = $region12
      $region11: #{tpu_custom_call.1} parent=5 // pred_region
        %s157 = ssub.s32 %s14, 1
        // Predicated region
        $region13: #{tpu_custom_call.1} parent=11 // pred_check
          %p158 = pneg %p89
        $region14: #{tpu_custom_call.1} parent=11 // pred_check_branch
          %160 = sbr.rel (%p158) target = $region16
        $region15: #{tpu_custom_call.1} parent=11 // pred_region
          %s161 = smul.u32 16, %s25
          %p162 = scmp.lt.s32.totalorder %s161, 15
          %s163 = scalar_select %p162, %s161, 15
          %p164 = scmp.lt.s32.totalorder %s26, 0
          %s165 = scalar_select %p164, %s26, 0
          %s166 = sadd.s32 %s165, %s163
          %s167 = smul.addr %s166, 8
          %s168 = scalar_lea.vmem %s2, %s167
          %s169 = smul.u32 16, %s25
        $region16: #{tpu_custom_call.1} parent=11 // pred_fallthru
          _
        // Predicated region
        $region17: #{tpu_custom_call.1} parent=11 // pred_check
          %p170 = pneg %p115
        $region18: #{tpu_custom_call.1} parent=11 // pred_check_branch
          %172 = sbr.rel (%p170) target = $region20
        $region19: #{tpu_custom_call.1} parent=11 // pred_region
          %p173 = scmp.lt.s32.totalorder %s25, 0
          %s174 = scalar_select %p173, %s25, 0
          %s175 = scalar_lea.vmem %s3, %s174
        $region20: #{tpu_custom_call.1} parent=11 // pred_fallthru
          _
      $region12: #{tpu_custom_call.1} parent=5 // pred_fallthru
        _
      %p176 = scmp.lt.s32.totalorder %s14, 2
      // Predicated region
      $region21: #{tpu_custom_call.1} parent=5 // pred_check
        %p177 = pneg %p176
      $region22: #{tpu_custom_call.1} parent=5 // pred_check_branch
        %179 = sbr.rel (%p177) target = $region24
      $region23: #{tpu_custom_call.1} parent=5 // pred_region
        // Predicated region
        $region25: #{tpu_custom_call.1} parent=23 // pred_check
          %p180 = pneg %p55
        $region26: #{tpu_custom_call.1} parent=23 // pred_check_branch
          %182 = sbr.rel (%p180) target = $region28
        $region27: #{tpu_custom_call.1} parent=23 // pred_region
          %p183 = scmp.lt.s32.totalorder %s21, 1
          %s184 = scalar_select %p183, %s21, 1
          %p185 = scmp.lt.s32.totalorder %s23, 0
          %s186 = scalar_select %p185, %s23, 0
          %s187 = sadd.s32 %s186, %s184
          %s188 = smul.addr %s187, 8
          %s189 = scalar_lea.vmem %s1, %s188
        $region28: #{tpu_custom_call.1} parent=23 // pred_fallthru
          _
      $region24: #{tpu_custom_call.1} parent=5 // pred_fallthru
        _
      %p190 = scmp.le.s32.totalorder 1, %s14
      %p191 = scmp.lt.s32.totalorder %s14, 3
      %p192 = pnand %p190, %p191
      %p193 = pneg %p192
      // Predicated region
      $region29: #{tpu_custom_call.1} parent=5 // pred_check
        _
      $region30: #{tpu_custom_call.1} parent=5 // pred_check_branch
        %195 = sbr.rel (%p192) target = $region32
      $region31: #{tpu_custom_call.1} parent=5 // pred_region
        %s196 = ssub.s32 %s14, 1
        %p197 = scmp.lt.s32.totalorder %s24, 1
        %s198 = scalar_select %p197, %s24, 1
        %p199 = scmp.lt.s32.totalorder %s26, 0
        %s200 = scalar_select %p199, %s26, 0
        %s201 = sadd.s32 %s200, %s198
        %s202 = smul.addr %s201, 8
        %s203 = scalar_lea.vmem %s1, %s202
        %p204 = pneg %p61
        %p205 = pneg %p58
        %s206 = smul.u32 16, %s25
        %p207 = scmp.lt.s32.totalorder %s206, 15
        %s208 = scalar_select %p207, %s206, 15
        %p209 = scmp.lt.s32.totalorder %s26, 0
        %s210 = scalar_select %p209, %s26, 0
        %s211 = sadd.s32 %s210, %s208
        %s212 = smul.addr %s211, 8
        %s213 = scalar_lea.vmem %s2, %s212
        %p214 = pneg %p89
        %p215 = pneg %p86
        %p216 = scmp.lt.s32.totalorder %s25, 0
        %s217 = scalar_select %p216, %s25, 0
        %s218 = scalar_lea.vmem %s3, %s217
        %p219 = pneg %p115
        %p220 = pneg %p112
        %p221 = pneg %p143
        %p222 = pneg %p140
        %s223 = sand.u32 %s130, 1
        %s224 = scalar_lea.sflag [#allocation6], %s223
        %s225 = sand.u32 %s130, 1
        %s226 = smul.addr %s225, 8
        %s227 = scalar_lea.vmem [#allocation5], %s226
        %p228 = scmp.lt.s32.totalorder %s24, 1
        %s229 = scalar_select %p228, %s24, 1
        %p230 = scmp.lt.s32.totalorder %s26, 0
        %s231 = scalar_select %p230, %s26, 0
        %s232 = sadd.s32 %s231, %s229
        %s233 = smul.addr %s232, 8
        %s234 = scalar_lea.vmem %s1, %s233
        %s235 = smul.u32 16, %s25
        %p236 = scmp.lt.s32.totalorder %s235, 15
        %s237 = scalar_select %p236, %s235, 15
        %p238 = scmp.lt.s32.totalorder %s26, 0
        %s239 = scalar_select %p238, %s26, 0
        %s240 = sadd.s32 %s239, %s237
        %s241 = smul.addr %s240, 8
        %s242 = scalar_lea.vmem %s2, %s241
        %s243 = smul.u32 16, %s25
        %p244 = scmp.lt.s32.totalorder %s25, 0
        %s245 = scalar_select %p244, %s25, 0
        %s246 = scalar_lea.vmem %s3, %s245
        %p247 = scmp.eq.s32.totalorder %s26, 0
        // Predicated region
        $region33: #{tpu_custom_call.1} parent=31 // pred_check
          %p248 = pneg %p247
        $region34: #{tpu_custom_call.1} parent=31 // pred_check_branch
          %250 = sbr.rel (%p248) target = $region36
        $region35: #{tpu_custom_call.1} parent=31 // pred_region
          %v251 = vld [vmem:[%s246] sm:$0x1]
          %v253 = vlaneseq
          %v254 = vshrl.u32 %v253, 7
          %v255 = vsub.s32 0, %v254
          %v256 = vrot.slane %v251, %v255
          %258 = vst [vmem:[#allocation2] sm:$0xff] %v256
        $region36: #{tpu_custom_call.1} parent=31 // pred_fallthru
          _
        %v259 = vld [vmem:[%s234] sm:$0xff]
        %v260 = vld [vmem:[%s242] sm:$0xff]
        %v261 = vld [vmem:[%s242 + $0x8] sm:$0xff]
        %v262 = vld [vmem:[%s242 + $0x10] sm:$0xff]
        %v263 = vld [vmem:[%s242 + $0x18] sm:$0xff]
        %v264 = vld [vmem:[%s242 + $0x20] sm:$0xff]
        %v265 = vld [vmem:[%s242 + $0x28] sm:$0xff]
        %v266 = vld [vmem:[%s242 + $0x30] sm:$0xff]
        %v267 = vld [vmem:[%s242 + $0x38] sm:$0xff]
        %v268 = vld [vmem:[%s242 + $0x40] sm:$0xff]
        %v269 = vld [vmem:[%s242 + $0x48] sm:$0xff]
        %v270 = vld [vmem:[%s242 + $0x50] sm:$0xff]
        %v271 = vld [vmem:[%s242 + $0x58] sm:$0xff]
        %v272 = vld [vmem:[%s242 + $0x60] sm:$0xff]
        %v273 = vld [vmem:[%s242 + $0x68] sm:$0xff]
        %v274 = vld [vmem:[%s242 + $0x70] sm:$0xff]
        %v275 = vld [vmem:[%s242 + $0x78] sm:$0xff]
        %v276 = vld [vmem:[#allocation2] sm:$0xff]
        %vm277 = vcmask 261120
        %v279 = vsel %vm277, %v259, 0
        %v282 = vsel %vm277, %v260, 0
        %v285 = vsel %vm277, %v261, 0
        %v288 = vsel %vm277, %v262, 0
        %v291 = vsel %vm277, %v263, 0
        %v294 = vsel %vm277, %v264, 0
        %v297 = vsel %vm277, %v265, 0
        %v300 = vsel %vm277, %v266, 0
        %v303 = vsel %vm277, %v267, 0
        %v306 = vsel %vm277, %v268, 0
        %v309 = vsel %vm277, %v269, 0
        %v312 = vsel %vm277, %v270, 0
        %v315 = vsel %vm277, %v271, 0
        %v318 = vsel %vm277, %v272, 0
        %v321 = vsel %vm277, %v273, 0
        %v324 = vsel %vm277, %v274, 0
        %v327 = vsel %vm277, %v275, 0
        %329 = vmatprep.subr.mxu0 0.0
        %330 = vmatpush1.xpose.msra.mxu0 %v282
        %331 = vmatprep.subr.mxu0 0.0
        %332 = vmatpush1.xpose.msra.mxu0 %v285
        %333 = vmatprep.subr.mxu0 0.0
        %334 = vmatpush1.xpose.msra.mxu0 %v288
        %335 = vmatprep.subr.mxu0 0.0
        %336 = vmatpush1.xpose.msra.mxu0 %v291
        %337 = vmatprep.subr.mxu0 0.0
        %338 = vmatpush1.xpose.msra.mxu0 %v294
        %339 = vmatprep.subr.mxu0 0.0
        %340 = vmatpush1.xpose.msra.mxu0 %v297
        %341 = vmatprep.subr.mxu0 0.0
        %342 = vmatpush1.xpose.msra.mxu0 %v300
        %343 = vmatprep.subr.mxu0 0.0
        %344 = vmatpush1.xpose.msra.mxu0 %v303
        %345 = vmatprep.subr.mxu0 0.0
        %346 = vmatpush1.xpose.msra.mxu0 %v306
        %347 = vmatprep.subr.mxu0 0.0
        %348 = vmatpush1.xpose.msra.mxu0 %v309
        %349 = vmatprep.subr.mxu0 0.0
        %350 = vmatpush1.xpose.msra.mxu0 %v312
        %351 = vmatprep.subr.mxu0 0.0
        %352 = vmatpush1.xpose.msra.mxu0 %v315
        %353 = vmatprep.subr.mxu0 0.0
        %354 = vmatpush1.xpose.msra.mxu0 %v318
        %355 = vmatprep.subr.mxu0 0.0
        %356 = vmatpush1.xpose.msra.mxu0 %v321
        %357 = vmatprep.subr.mxu0 0.0
        %358 = vmatpush1.xpose.msra.mxu0 %v324
        %359 = vmatprep.subr.mxu0 0.0
        %360 = vmatpush1.xpose.msra.mxu0 %v327
        %361 = vmatprep.subr.mxu0 0.0
        %362 = vmatpush1.xpose.msra.mxu0 0.0
        %363 = vmatprep.subr.mxu0 0.0
        %364 = vmatpush1.xpose.msra.mxu0 0.0
        %365 = vmatprep.subr.mxu0 0.0
        %366 = vmatpush1.xpose.msra.mxu0 0.0
        %367 = vmatprep.subr.mxu0 0.0
        %368 = vmatpush1.xpose.msra.mxu0 0.0
        %369 = vmatprep.subr.mxu0 0.0
        %370 = vmatpush1.xpose.msra.mxu0 0.0
        %371 = vmatprep.subr.mxu0 0.0
        %372 = vmatpush1.xpose.msra.mxu0 0.0
        %373 = vmatprep.subr.mxu0 0.0
        %374 = vmatpush1.xpose.msra.mxu0 0.0
        %375 = vmatprep.subr.mxu0 0.0
        %376 = vmatpush1.xpose.msra.mxu0 0.0
        %377 = vmatprep.subr.mxu0 0.0
        %378 = vmatpush1.xpose.msra.mxu0 0.0
        %379 = vmatprep.subr.mxu0 0.0
        %380 = vmatpush1.xpose.msra.mxu0 0.0
        %381 = vmatprep.subr.mxu0 0.0
        %382 = vmatpush1.xpose.msra.mxu0 0.0
        %383 = vmatprep.subr.mxu0 0.0
        %384 = vmatpush1.xpose.msra.mxu0 0.0
        %385 = vmatprep.subr.mxu0 0.0
        %386 = vmatpush1.xpose.msra.mxu0 0.0
        %387 = vmatprep.subr.mxu0 0.0
        %388 = vmatpush1.xpose.msra.mxu0 0.0
        %389 = vmatprep.subr.mxu0 0.0
        %390 = vmatpush1.xpose.msra.mxu0 0.0
        %391 = vmatprep.subr.mxu0 0.0
        %392 = vmatpush1.xpose.msra.mxu0 0.0
        %393 = vmatprep.mubr.f32.mxu0 0.0
        %394 = vmatmul.mubr.f32.gmra.mrb[0].mxu0 %v279
        %v395 = vpop.f32.mrb[0].mxu0
        %v396 = vadd.f32 0.0, %v395
        %v397 = vpop.f32.mrb[0].mxu0
        %398 = vdwg.mxu0
        %v399 = vadd.f32 %v276, %v396
        %400 = vst [vmem:[#allocation2] sm:$0xff] %v399
        // Predicated region
        $region37: #{tpu_custom_call.1} parent=31 // pred_check
          %p401 = pneg %p247
        $region38: #{tpu_custom_call.1} parent=31 // pred_check_branch
          %403 = sbr.rel (%p401) target = $region40
        $region39: #{tpu_custom_call.1} parent=31 // pred_region
          %v404 = vld [vmem:[#allocation2] sm:$0xff]
          %v405 = vmax.f32 %v404, 0.0
          %406 = vst [vmem:[%s227] sm:$0xff] %v405
        $region40: #{tpu_custom_call.1} parent=31 // pred_fallthru
          _
        %s407 = sand.u32 %s130, 1
        %s408 = scalar_lea.sflag [#allocation6], %s407
        %s409 = sand.u32 %s130, 1
        %s410 = smul.addr %s409, 8
        %s411 = scalar_lea.vmem [#allocation5], %s410
        // Predicated region
        $region41: #{tpu_custom_call.1} parent=31 // pred_check
          %p412 = pneg %p140
        $region42: #{tpu_custom_call.1} parent=31 // pred_check_branch
          %414 = sbr.rel (%p412) target = $region44
        $region43: #{tpu_custom_call.1} parent=31 // pred_region
          %s416 = ssub.s32 128, 128
          %417 = vsyncadd %s408, %s416
          %s418 = sadd.s32 %s25, %s24
          %s419 = smul.addr %s418, 128
          %s420 = scalar_lea.hbm %s4, %s419
          %s422 = sshll.u32 %s411, 4
          %s423 = int_to_ptr.vmem [resolvable:$true] %s422
          %425 = dma.vmem_to_hbm [thread:$0]  %s423, 128, %s420, %s408
        $region44: #{tpu_custom_call.1} parent=31 // pred_fallthru
          _
      $region32: #{tpu_custom_call.1} parent=5 // pred_fallthru
        _
      %p426 = scmp.le.s32.totalorder 2, %s14
      // Predicated region
      $region45: #{tpu_custom_call.1} parent=5 // pred_check
        %p427 = pneg %p426
      $region46: #{tpu_custom_call.1} parent=5 // pred_check_branch
        %429 = sbr.rel (%p427) target = $region48
      $region47: #{tpu_custom_call.1} parent=5 // pred_region
        %s430 = ssub.s32 %s14, 2
        // Predicated region
        $region49: #{tpu_custom_call.1} parent=47 // pred_check
          %p431 = pneg %p146
        $region50: #{tpu_custom_call.1} parent=47 // pred_check_branch
          %433 = sbr.rel (%p431) target = $region52
        $region51: #{tpu_custom_call.1} parent=47 // pred_region
          %s434 = sand.u32 %s131, 1
          %s435 = scalar_lea.sflag [#allocation6], %s434
          %s436 = sand.u32 %s131, 1
          %s437 = smul.addr %s436, 8
          %s438 = scalar_lea.vmem [#allocation5], %s437
          %439 = dma.done %s435, 128
        $region52: #{tpu_custom_call.1} parent=47 // pred_fallthru
          _
      $region48: #{tpu_custom_call.1} parent=5 // pred_fallthru
        _
    $region6: #{tpu_custom_call.1} parent=1 // loop_footer
      %s18 = sadd.s32 1, %s14
    $region7: #{tpu_custom_call.1} parent=1 // loop_footer_branch
      %13 = sbr.rel target = $region3
    $region8: #{tpu_custom_call.1} parent=1 // loop_exit
      _
    %440 = vsyncpa [#allocation6], 1
    %s441 = scalar_lea.sflag [#allocation6], 1
    %442 = vsyncpa %s441, 1

</llo_original>
